<compile_context>
chip_gen: v6e
topology: v6e:2x2x1
jax: 0.10.0
libtpu: 0.0.40
codegen_flags: <defaults>
</compile_context>

<pallas_src>
import math
import jax
import jax.numpy as jnp
from jax.experimental import pallas as pl
from jax.experimental.pallas import tpu as pltpu

_INV_SQRT2 = 1.0 / math.sqrt(2.0)


def _round_up(x, m):
    return ((x + m - 1) // m) * m


# ----------------------------------------------------------------------------- kernels

def _ffn_kernel_fused(x_ref, w1_ref, b1_ref, w2_ref, b2_ref, o_ref):
    """Accumulates directly into the resident output block (used when out dtype is f32
    or the hidden axis has a single grid step)."""
    k = pl.program_id(1)

    h = jnp.dot(x_ref[...], w1_ref[...], preferred_element_type=jnp.float32)
    h = h + b1_ref[...]                                   # b1 kept in f32
    # Exact (erf) GELU == torch.nn.GELU(approximate='none'); Dropout(p=0.0) == identity.
    h = 0.5 * h * (1.0 + jax.lax.erf(h * _INV_SQRT2))
    contrib = jnp.dot(h.astype(w2_ref.dtype), w2_ref[...],
                      preferred_element_type=jnp.float32)

    @pl.when(k == 0)
    def _first():
        o_ref[...] = (contrib + b2_ref[...]).astype(o_ref.dtype)

    @pl.when(k > 0)
    def _accum():
        o_ref[...] = (o_ref[...].astype(jnp.float32) + contrib).astype(o_ref.dtype)


def _ffn_kernel_scratch(x_ref, w1_ref, b1_ref, w2_ref, b2_ref, o_ref, acc_ref):
    """f32 VMEM-scratch accumulator path (only for non-f32 outputs with >1 hidden step)."""
    k = pl.program_id(1)

    @pl.when(k == 0)
    def _init():
        acc_ref[...] = jnp.zeros_like(acc_ref)

    h = jnp.dot(x_ref[...], w1_ref[...], preferred_element_type=jnp.float32)
    h = h + b1_ref[...]
    h = 0.5 * h * (1.0 + jax.lax.erf(h * _INV_SQRT2))
    acc_ref[...] += jnp.dot(h.astype(w2_ref.dtype), w2_ref[...],
                            preferred_element_type=jnp.float32)

    @pl.when(k == pl.num_programs(1) - 1)
    def _finalize():
        o_ref[...] = (acc_ref[...] + b2_ref[...]).astype(o_ref.dtype)


# ----------------------------------------------------------------------------- tiling

def _vmem_budget_and_limit():
    """Tile-selection budget (~75% of physical VMEM) and the scoped-vmem limit to request."""
    cap = None
    try:
        cap = getattr(pltpu.get_tpu_info(), "vmem_capacity_bytes", None)
    except Exception:
        cap = None
    if not cap:
        cap = 64 * 1024 * 1024          # conservative fallback (v7x-sized)
    budget = max(32 * 1024 * 1024, int(cap * 0.75))        # ~96 MiB v5e/v6e, ~48 MiB v7x
    limit = min(int(cap * 0.8), budget + (16 << 20))       # headroom for compiler scratch
    return budget, limit


def _choose_tiles(n_rows, d_pad, h_pad128, in_isz, out_isz, row_tile, hidden_tile,
                  budget, f32_out):
    # Row tile: big LHS tiles for the MXU (arithmetic intensity), clamped for small inputs.
    tm = min(row_tile, _round_up(n_rows, 8))
    tm = max(8, _round_up(tm, 8))

    def io_bytes(tm_):
        b = 2 * tm_ * d_pad * in_isz            # x tile, double-buffered
        b += 2 * tm_ * d_pad * out_isz          # out tile, double-buffered
        if not f32_out:
            b += 4 * tm_ * d_pad                # possible f32 scratch accumulator
        return b

    # Keep x/out tiles to at most half the budget so the streamed weight tiles get the rest.
    while tm > 128 and io_bytes(tm) > budget // 2:
        tm = max(128, _round_up(tm // 2, 8))

    if hidden_tile is None:
        remaining = max(budget - io_bytes(tm), 4 * d_pad * in_isz * 256)
        per_hidden = 2 * 2 * d_pad * in_isz     # W1 col-tile + W2 row-tile, double-buffered
        tk = (remaining // per_hidden) // 256 * 256
        tk = max(256, int(tk))
        if tk >= h_pad128:
            tk = h_pad128                       # hidden axis collapses to a single step
    else:
        tk = min(_round_up(hidden_tile, 128), h_pad128)
    tk = max(128, tk)
    return tm, tk


# ----------------------------------------------------------------------------- wrapper

def feed_forward(x, w1, b1, w2, b2, *, row_tile=512, hidden_tile=None,
                 compute_dtype=jnp.bfloat16):
    """x: [..., d_model]; w1: [d_model, hidden]; b1: [hidden];
       w2: [hidden, d_model]; b2: [d_model].  Returns gelu(x @ W1 + b1) @ W2 + b2.

    compute_dtype: dtype fed to the MXU (default bf16, f32 accumulation).  Pass None to
    keep the input dtype (exact f32 path)."""
    d_model = x.shape[-1]
    hidden = w1.shape[1]
    lead = x.shape[:-1]
    out_dtype = x.dtype

    if compute_dtype is not None:
        x = x.astype(compute_dtype)
        w1 = w1.astype(compute_dtype)
        w2 = w2.astype(compute_dtype)
    # Biases stay f32: they are added post-accumulation, cost is negligible.
    b1 = b1.astype(jnp.float32)
    b2 = b2.astype(jnp.float32)

    x2d = x.reshape((-1, d_model))
    n_rows = x2d.shape[0]
    in_isz = jnp.dtype(x.dtype).itemsize
    out_isz = jnp.dtype(out_dtype).itemsize
    f32_out = jnp.dtype(out_dtype) == jnp.dtype(jnp.float32)

    # Lane-dense feature dims (multiples of 128).
    d_pad = _round_up(d_model, 128)
    h_pad128 = _round_up(hidden, 128)

    budget, vmem_limit = _vmem_budget_and_limit()
    tm, tk = _choose_tiles(n_rows, d_pad, h_pad128, in_isz, out_isz,
                           row_tile, hidden_tile, budget, f32_out)
    h_pad = _round_up(h_pad128, tk)            # hidden padded to a multiple of the tile
    n_pad = _round_up(n_rows, tm)
    n_k = h_pad // tk

    # Zero-pad only when needed (pre-pad weights at init to avoid per-call HBM traffic).
    if n_pad != n_rows or d_pad != d_model:
        x2d = jnp.pad(x2d, ((0, n_pad - n_rows), (0, d_pad - d_model)))
    w1p = w1 if (d_pad == d_model and h_pad == hidden) else \
        jnp.pad(w1, ((0, d_pad - d_model), (0, h_pad - hidden)))
    w2p = w2 if (d_pad == d_model and h_pad == hidden) else \
        jnp.pad(w2, ((0, h_pad - hidden), (0, d_pad - d_model)))
    b1p = (b1 if h_pad == hidden else jnp.pad(b1, (0, h_pad - hidden))).reshape((1, h_pad))
    b2p = (b2 if d_pad == d_model else jnp.pad(b2, (0, d_pad - d_model))).reshape((1, d_pad))

    grid = (n_pad // tm, n_k)

    # Direct accumulation into the resident output block when it is safe (f32 output) or
    # trivially correct (single hidden step); otherwise use an f32 VMEM scratch.
    use_scratch = (not f32_out) and (n_k > 1)
    kernel = _ffn_kernel_scratch if use_scratch else _ffn_kernel_fused
    scratch_shapes = [pltpu.VMEM((tm, d_pad), jnp.float32)] if use_scratch else []

    flops = 4 * n_pad * d_pad * h_pad
    bytes_accessed = (n_pad * d_pad * in_isz + n_pad * d_pad * out_isz     # x + out
                      + grid[0] * 2 * d_pad * h_pad * in_isz               # streamed weights
                      + 4 * (h_pad + d_pad))                               # biases
    cost = pl.CostEstimate(flops=int(flops), transcendentals=int(n_pad * h_pad),
                           bytes_accessed=int(bytes_accessed))

    out = pl.pallas_call(
        kernel,
        out_shape=jax.ShapeDtypeStruct((n_pad, d_pad), out_dtype),
        grid_spec=pltpu.PrefetchScalarGridSpec(
            num_scalar_prefetch=0,
            grid=grid,
            in_specs=[
                pl.BlockSpec((tm, d_pad), lambda i, k: (i, 0)),   # x row-tile
                pl.BlockSpec((d_pad, tk), lambda i, k: (0, k)),   # W1 column-tile
                pl.BlockSpec((1, tk), lambda i, k: (0, k)),       # b1 tile (f32)
                pl.BlockSpec((tk, d_pad), lambda i, k: (k, 0)),   # W2 row-tile
                pl.BlockSpec((1, d_pad), lambda i, k: (0, 0)),    # b2 (invariant, f32)
            ],
            out_specs=pl.BlockSpec((tm, d_pad), lambda i, k: (i, 0)),
            scratch_shapes=scratch_shapes,
        ),
        compiler_params=pltpu.CompilerParams(
            dimension_semantics=("parallel", "arbitrary"),
            vmem_limit_bytes=int(vmem_limit),
        ),
        cost_estimate=cost,
    )(x2d, w1p, b1p, w2p, b2p)

    out = out[:n_rows, :d_model]
    return out.reshape(lead + (d_model,))


def init_params(key, d_model, hidden_dim, dtype=jnp.float32):
    """Deterministic init mimicking torch.nn.Linear defaults (uniform +/- 1/sqrt(fan_in))."""
    k1, k2, k3, k4 = jax.random.split(key, 4)
    bound1 = 1.0 / math.sqrt(d_model)
    bound2 = 1.0 / math.sqrt(hidden_dim)
    w1 = jax.random.uniform(k1, (d_model, hidden_dim), dtype, -bound1, bound1)
    b1 = jax.random.uniform(k2, (hidden_dim,), dtype, -bound1, bound1)
    w2 = jax.random.uniform(k3, (hidden_dim, d_model), dtype, -bound2, bound2)
    b2 = jax.random.uniform(k4, (d_model,), dtype, -bound2, bound2)
    return w1, b1, w2, b2


if __name__ == "__main__":
    # Small shapes consistent with the module: batch=2, seq=8, d_model=32, hidden=64.
    B, S, D, H = 2, 8, 32, 64
    key = jax.random.PRNGKey(0)
    kx, kp = jax.random.split(key)
    x = jax.random.normal(kx, (B, S, D), dtype=jnp.float32)
    w1, b1, w2, b2 = init_params(kp, D, H)

    # Pure-JAX reference (exact-erf GELU; Dropout(p=0) is identity).
    h_ref = x @ w1 + b1
    h_ref = 0.5 * h_ref * (1.0 + jax.lax.erf(h_ref / jnp.sqrt(2.0)))
    ref = h_ref @ w2 + b2

    # Exact f32 MXU path: tight-tolerance correctness check.
    out_f32 = jax.block_until_ready(feed_forward(x, w1, b1, w2, b2, compute_dtype=None))
    assert out_f32.shape == (B, S, D)
    assert jnp.allclose(out_f32, ref, atol=1e-5, rtol=1e-5)

    # Default fast path (bf16 MXU inputs, f32 accumulation): looser tolerance.
    out = jax.block_until_ready(feed_forward(x, w1, b1, w2, b2))
    assert out.shape == (B, S, D)
    assert jnp.allclose(out, ref, atol=3e-2, rtol=3e-2)

    print("KERNEL_OK")
</pallas_src>

<mosaic_0001>
module attributes {stable_mosaic.version = 11 : i64} {
  func.func @_ffn_kernel_fused(%arg0: i32, %arg1: i32, %arg2: memref<16x128xf32, #tpu.memory_space<vmem>>, %arg3: memref<128x128xf32, #tpu.memory_space<vmem>>, %arg4: memref<1x128xf32, #tpu.memory_space<vmem>>, %arg5: memref<128x128xf32, #tpu.memory_space<vmem>>, %arg6: memref<1x128xf32, #tpu.memory_space<vmem>>, %arg7: memref<16x128xf32, #tpu.memory_space<vmem>>) attributes {dimension_semantics = [#tpu.dimension_semantics<parallel>, #tpu.dimension_semantics<arbitrary>], iteration_bounds = array<i64: 1, 1>, scalar_prefetch = 0 : i64, scratch_operands = 0 : i64, tpu.core_type = #tpu.core_type<tc>, window_params = [{transform_indices = @transform_0, window_bounds = array<i64: 16, 128>}, {transform_indices = @transform_1, window_bounds = array<i64: 128, 128>}, {transform_indices = @transform_2, window_bounds = array<i64: 1, 128>}, {transform_indices = @transform_3, window_bounds = array<i64: 128, 128>}, {pipeline_mode = #tpu.pipeline_mode<synchronous>, transform_indices = @transform_4, window_bounds = array<i64: 1, 128>}, {transform_indices = @transform_5, window_bounds = array<i64: 16, 128>}]} {
    %c0 = arith.constant 0 : index
    %c0_0 = arith.constant 0 : index
    %0 = vector.load %arg2[%c0, %c0_0] : memref<16x128xf32, #tpu.memory_space<vmem>>, vector<16x128xf32>
    %c0_1 = arith.constant 0 : index
    %c0_2 = arith.constant 0 : index
    %1 = vector.load %arg3[%c0_1, %c0_2] : memref<128x128xf32, #tpu.memory_space<vmem>>, vector<128x128xf32>
    %cst = arith.constant dense<0.000000e+00> : vector<16x128xf32>
    %2 = tpu.matmul %0, %1, %cst {dimension_numbers = #tpu.dot_dimension_numbers<[1], [0], [0], [1], [0, 0, 1, 1], [], []>} : vector<16x128xf32>, vector<128x128xf32>, vector<16x128xf32> -> vector<16x128xf32>
    %c0_3 = arith.constant 0 : index
    %c0_4 = arith.constant 0 : index
    %3 = vector.load %arg4[%c0_3, %c0_4] : memref<1x128xf32, #tpu.memory_space<vmem>>, vector<1x128xf32>
    %4 = vector.broadcast %3 : vector<1x128xf32> to vector<16x128xf32>
    %5 = arith.addf %2, %4 : vector<16x128xf32>
    %cst_5 = arith.constant 5.000000e-01 : f32
    %6 = vector.broadcast %cst_5 : f32 to vector<16x128xf32>
    %7 = arith.mulf %6, %5 : vector<16x128xf32>
    %cst_6 = arith.constant 0.707106769 : f32
    %8 = vector.broadcast %cst_6 : f32 to vector<16x128xf32>
    %9 = arith.mulf %5, %8 : vector<16x128xf32>
    %10 = math.erf %9 : vector<16x128xf32>
    %cst_7 = arith.constant 1.000000e+00 : f32
    %11 = vector.broadcast %cst_7 : f32 to vector<16x128xf32>
    %12 = arith.addf %11, %10 : vector<16x128xf32>
    %13 = arith.mulf %7, %12 : vector<16x128xf32>
    %c0_8 = arith.constant 0 : index
    %c0_9 = arith.constant 0 : index
    %14 = vector.load %arg5[%c0_8, %c0_9] : memref<128x128xf32, #tpu.memory_space<vmem>>, vector<128x128xf32>
    %cst_10 = arith.constant dense<0.000000e+00> : vector<16x128xf32>
    %15 = tpu.matmul %13, %14, %cst_10 {dimension_numbers = #tpu.dot_dimension_numbers<[1], [0], [0], [1], [0, 0, 1, 1], [], []>} : vector<16x128xf32>, vector<128x128xf32>, vector<16x128xf32> -> vector<16x128xf32>
    %c0_i32 = arith.constant 0 : i32
    %16 = arith.cmpi eq, %arg1, %c0_i32 : i32
    %17 = arith.extui %16 : i1 to i32
    %c0_i32_11 = arith.constant 0 : i32
    %18 = arith.cmpi ne, %17, %c0_i32_11 : i32
    scf.if %18 {
      %c0_14 = arith.constant 0 : index
      %c0_15 = arith.constant 0 : index
      %22 = vector.load %arg6[%c0_14, %c0_15] : memref<1x128xf32, #tpu.memory_space<vmem>>, vector<1x128xf32>
      %23 = vector.broadcast %22 : vector<1x128xf32> to vector<16x128xf32>
      %24 = arith.addf %15, %23 : vector<16x128xf32>
      %c0_16 = arith.constant 0 : index
      %c0_17 = arith.constant 0 : index
      %25 = vector.load %arg7[%c0_16, %c0_17] : memref<16x128xf32, #tpu.memory_space<vmem>>, vector<16x128xf32>
      tpu.vector_store %arg7[%c0_16, %c0_17], %24 {strides = array<i32>} : memref<16x128xf32, #tpu.memory_space<vmem>>, vector<16x128xf32>,
    } else {
    }
    %c0_i32_12 = arith.constant 0 : i32
    %19 = arith.cmpi sgt, %arg1, %c0_i32_12 : i32
    %20 = arith.extui %19 : i1 to i32
    %c0_i32_13 = arith.constant 0 : i32
    %21 = arith.cmpi ne, %20, %c0_i32_13 : i32
    scf.if %21 {
      %c0_14 = arith.constant 0 : index
      %c0_15 = arith.constant 0 : index
      %22 = vector.load %arg7[%c0_14, %c0_15] : memref<16x128xf32, #tpu.memory_space<vmem>>, vector<16x128xf32>
      %23 = arith.addf %22, %15 : vector<16x128xf32>
      %c0_16 = arith.constant 0 : index
      %c0_17 = arith.constant 0 : index
      %24 = vector.load %arg7[%c0_16, %c0_17] : memref<16x128xf32, #tpu.memory_space<vmem>>, vector<16x128xf32>
      tpu.vector_store %arg7[%c0_16, %c0_17], %23 {strides = array<i32>} : memref<16x128xf32, #tpu.memory_space<vmem>>, vector<16x128xf32>,
    } else {
    }
    return
  }
  func.func @transform_0(%arg0: i32, %arg1: i32) -> (i32, i32) {
    %c0_i32 = arith.constant 0 : i32
    %c0_i32_0 = arith.constant 0 : i32
    return %arg0, %c0_i32 : i32, i32
  }
  func.func @transform_1(%arg0: i32, %arg1: i32) -> (i32, i32) {
    %c0_i32 = arith.constant 0 : i32
    %c0_i32_0 = arith.constant 0 : i32
    return %c0_i32, %arg1 : i32, i32
  }
  func.func @transform_2(%arg0: i32, %arg1: i32) -> (i32, i32) {
    %c0_i32 = arith.constant 0 : i32
    %c0_i32_0 = arith.constant 0 : i32
    return %c0_i32, %arg1 : i32, i32
  }
  func.func @transform_3(%arg0: i32, %arg1: i32) -> (i32, i32) {
    %c0_i32 = arith.constant 0 : i32
    %c0_i32_0 = arith.constant 0 : i32
    return %arg1, %c0_i32 : i32, i32
  }
  func.func @transform_4(%arg0: i32, %arg1: i32) -> (i32, i32) {
    %c0_i32 = arith.constant 0 : i32
    %c0_i32_0 = arith.constant 0 : i32
    %c0_i32_1 = arith.constant 0 : i32
    return %c0_i32, %c0_i32_0 : i32, i32
  }
  func.func @transform_5(%arg0: i32, %arg1: i32) -> (i32, i32) {
    %c0_i32 = arith.constant 0 : i32
    %c0_i32_0 = arith.constant 0 : i32
    return %arg0, %c0_i32 : i32, i32
  }
}

</mosaic_0001>

<llo_original>
// kernel: tpu_custom_call.1
$region0: #{tpu_custom_call.1}
  #allocation0 [shape = 'u32[]', space=smem, size = 0x4, offset = 0x4, fixed_abs, tag = 'smem constant byte address 0x4 - core index']
  #allocation1 [shape = 'u32[144,128]{1,0:T(1,128)}', space=vmem, size = 0x12000, scoped, tag = 'internal scratch']
  %s0 = inlined_call_operand.hbm [shape: f32[16,128], index: 0, kind: input, shape index: {}]
  %s1 = inlined_call_operand.hbm [shape: f32[128,128], index: 1, kind: input, shape index: {}]
  %s2 = inlined_call_operand.vmem [shape: f32[1,128], index: 2, kind: input, shape index: {}]
  %s3 = inlined_call_operand.hbm [shape: f32[128,128], index: 3, kind: input, shape index: {}]
  %s4 = inlined_call_operand.vmem [shape: f32[1,128], index: 4, kind: input, shape index: {}]
  %s5 = inlined_call_operand.hbm [shape: f32[16,128], index: 5, kind: output, shape index: {}]
  %s6 = sld [smem:[#allocation0]]
  $region50: #{tpu_custom_call.1} parent=0
    _
  %s8 = ssub.s32 1, %s6
  %s9 = scalar_select 0, %s8, %s6
  $region1: #{tpu_custom_call.1} parent=0
    #allocation2 [shape = 'u8[8192]{0}', space=vmem, size = 0x2000, scoped, tag = 'input window, operand 0, single buffered']
    #allocation3 [shape = 's32[1]{0}', space=sflag, size = 0x4, scoped, tag = 'scoped memory for tpu_custom_call.1']
    #allocation4 [shape = 's32[1]{0}', space=sflag, size = 0x4, scoped, tag = 'scoped memory for tpu_custom_call.1']
    #allocation5 [shape = 'u8[65536]{0}', space=vmem, size = 0x10000, scoped, tag = 'input window, operand 1, single buffered']
    #allocation6 [shape = 's32[1]{0}', space=sflag, size = 0x4, scoped, tag = 'scoped memory for tpu_custom_call.1']
    #allocation7 [shape = 'u8[65536]{0}', space=vmem, size = 0x10000, scoped, tag = 'input window, operand 3, single buffered']
    #allocation8 [shape = 'u8[8192]{0}', space=vmem, size = 0x2000, scoped, tag = 'output window, operand 0, single buffered']
    %10 = vsyncpa [#allocation3], 0
    %11 = vsyncpa [#allocation6], 0
    %12 = vsyncpa [#allocation4], 0
    // Predicated region
    $region2: #{tpu_custom_call.1} parent=1 // pred_check
      _
    $region3: #{tpu_custom_call.1} parent=1 // pred_check_branch
      %14 = sbr.rel (0) target = $region5
    $region4: #{tpu_custom_call.1} parent=1 // pred_region
      %s16 = ssub.s32 256, 256
      %17 = vsyncadd [#allocation3], %s16
      %s18 = sshll.u32 [#allocation2], 4
      %s19 = int_to_ptr.vmem [resolvable:$true] %s18
      %24 = dma.hbm_to_vmem [thread:$0]  %s0, 256, %s19, [#allocation3], 128, 128, 8
    $region5: #{tpu_custom_call.1} parent=1 // pred_fallthru
      _
    // Predicated region
    $region6: #{tpu_custom_call.1} parent=1 // pred_check
      _
    $region7: #{tpu_custom_call.1} parent=1 // pred_check_branch
      %26 = sbr.rel (0) target = $region9
    $region8: #{tpu_custom_call.1} parent=1 // pred_region
      %s28 = ssub.s32 2048, 2048
      %29 = vsyncadd [#allocation6], %s28
      %s30 = sshll.u32 [#allocation5], 4
      %s31 = int_to_ptr.vmem [resolvable:$true] %s30
      %36 = dma.hbm_to_vmem [thread:$0]  %s1, 2048, %s31, [#allocation6], 128, 128, 8
    $region9: #{tpu_custom_call.1} parent=1 // pred_fallthru
      _
    // Predicated region
    $region10: #{tpu_custom_call.1} parent=1 // pred_check
      _
    $region11: #{tpu_custom_call.1} parent=1 // pred_check_branch
      %38 = sbr.rel (0) target = $region13
    $region12: #{tpu_custom_call.1} parent=1 // pred_region
      _
    $region13: #{tpu_custom_call.1} parent=1 // pred_fallthru
      _
    // Predicated region
    $region14: #{tpu_custom_call.1} parent=1 // pred_check
      _
    $region15: #{tpu_custom_call.1} parent=1 // pred_check_branch
      %40 = sbr.rel (0) target = $region17
    $region16: #{tpu_custom_call.1} parent=1 // pred_region
      %s42 = ssub.s32 2048, 2048
      %43 = vsyncadd [#allocation6], %s42
      %s44 = sshll.u32 [#allocation7], 4
      %s45 = int_to_ptr.vmem [resolvable:$true] %s44
      %50 = dma.hbm_to_vmem [thread:$0]  %s3, 2048, %s45, [#allocation6], 128, 128, 8
    $region17: #{tpu_custom_call.1} parent=1 // pred_fallthru
      _
    // Predicated region
    $region18: #{tpu_custom_call.1} parent=1 // pred_check
      _
    $region19: #{tpu_custom_call.1} parent=1 // pred_check_branch
      %52 = sbr.rel (0) target = $region21
    $region20: #{tpu_custom_call.1} parent=1 // pred_region
      _
    $region21: #{tpu_custom_call.1} parent=1 // pred_fallthru
      _
    // Predicated region
    $region22: #{tpu_custom_call.1} parent=1 // pred_check
      _
    $region23: #{tpu_custom_call.1} parent=1 // pred_check_branch
      %54 = sbr.rel (0) target = $region25
    $region24: #{tpu_custom_call.1} parent=1 // pred_region
      %55 = dma.done [#allocation3], 256
    $region25: #{tpu_custom_call.1} parent=1 // pred_fallthru
      _
    // Predicated region
    $region26: #{tpu_custom_call.1} parent=1 // pred_check
      _
    $region27: #{tpu_custom_call.1} parent=1 // pred_check_branch
      %57 = sbr.rel (0) target = $region29
    $region28: #{tpu_custom_call.1} parent=1 // pred_region
      %58 = dma.done [#allocation6], 2048
    $region29: #{tpu_custom_call.1} parent=1 // pred_fallthru
      _
    // Predicated region
    $region30: #{tpu_custom_call.1} parent=1 // pred_check
      _
    $region31: #{tpu_custom_call.1} parent=1 // pred_check_branch
      %60 = sbr.rel (0) target = $region33
    $region32: #{tpu_custom_call.1} parent=1 // pred_region
      %61 = dma.done [#allocation6], 2048
    $region33: #{tpu_custom_call.1} parent=1 // pred_fallthru
      _
    %v62 = vld [vmem:[#allocation2] sm:$0xff]
    %v63 = vld [vmem:[#allocation2 + $0x8] sm:$0xff]
    %v64 = vld [vmem:[#allocation5] sm:$0xff]
    %v65 = vld [vmem:[#allocation5 + $0x8] sm:$0xff]
    %v66 = vld [vmem:[#allocation5 + $0x10] sm:$0xff]
    %v67 = vld [vmem:[#allocation5 + $0x18] sm:$0xff]
    %v68 = vld [vmem:[#allocation5 + $0x20] sm:$0xff]
    %v69 = vld [vmem:[#allocation5 + $0x28] sm:$0xff]
    %v70 = vld [vmem:[#allocation5 + $0x30] sm:$0xff]
    %v71 = vld [vmem:[#allocation5 + $0x38] sm:$0xff]
    %v72 = vld [vmem:[#allocation5 + $0x40] sm:$0xff]
    %v73 = vld [vmem:[#allocation5 + $0x48] sm:$0xff]
    %v74 = vld [vmem:[#allocation5 + $0x50] sm:$0xff]
    %v75 = vld [vmem:[#allocation5 + $0x58] sm:$0xff]
    %v76 = vld [vmem:[#allocation5 + $0x60] sm:$0xff]
    %v77 = vld [vmem:[#allocation5 + $0x68] sm:$0xff]
    %v78 = vld [vmem:[#allocation5 + $0x70] sm:$0xff]
    %v79 = vld [vmem:[#allocation5 + $0x78] sm:$0xff]
    %v80 = vld [vmem:[%s2] sm:$0x1]
    %v82 = vlaneseq
    %v83 = vshrl.u32 %v82, 7
    %v84 = vsub.s32 0, %v83
    %v85 = vrot.slane %v80, %v84
    %87 = vmatprep.subr.mxu0 0.0
    %88 = vmatpush1.msra.mxu0 %v79
    %89 = vmatprep.subr.mxu0 0.0
    %90 = vmatpush1.msra.mxu0 %v78
    %91 = vmatprep.subr.mxu0 0.0
    %92 = vmatpush1.msra.mxu0 %v77
    %93 = vmatprep.subr.mxu0 0.0
    %94 = vmatpush1.msra.mxu0 %v76
    %95 = vmatprep.subr.mxu0 0.0
    %96 = vmatpush1.msra.mxu0 %v75
    %97 = vmatprep.subr.mxu0 0.0
    %98 = vmatpush1.msra.mxu0 %v74
    %99 = vmatprep.subr.mxu0 0.0
    %100 = vmatpush1.msra.mxu0 %v73
    %101 = vmatprep.subr.mxu0 0.0
    %102 = vmatpush1.msra.mxu0 %v72
    %103 = vmatprep.subr.mxu0 0.0
    %104 = vmatpush1.msra.mxu0 %v71
    %105 = vmatprep.subr.mxu0 0.0
    %106 = vmatpush1.msra.mxu0 %v70
    %107 = vmatprep.subr.mxu0 0.0
    %108 = vmatpush1.msra.mxu0 %v69
    %109 = vmatprep.subr.mxu0 0.0
    %110 = vmatpush1.msra.mxu0 %v68
    %111 = vmatprep.subr.mxu0 0.0
    %112 = vmatpush1.msra.mxu0 %v67
    %113 = vmatprep.subr.mxu0 0.0
    %114 = vmatpush1.msra.mxu0 %v66
    %115 = vmatprep.subr.mxu0 0.0
    %116 = vmatpush1.msra.mxu0 %v65
    %117 = vmatprep.subr.mxu0 0.0
    %118 = vmatpush1.msra.mxu0 %v64
    %119 = vmatprep.subr.mxu0 0.0
    %120 = vmatpush2.msra.mxu0 0.0
    %121 = vmatprep.subr.mxu0 0.0
    %122 = vmatpush2.msra.mxu0 0.0
    %123 = vmatprep.subr.mxu0 0.0
    %124 = vmatpush2.msra.mxu0 0.0
    %125 = vmatprep.subr.mxu0 0.0
    %126 = vmatpush2.msra.mxu0 0.0
    %127 = vmatprep.subr.mxu0 0.0
    %128 = vmatpush2.msra.mxu0 0.0
    %129 = vmatprep.subr.mxu0 0.0
    %130 = vmatpush2.msra.mxu0 0.0
    %131 = vmatprep.subr.mxu0 0.0
    %132 = vmatpush2.msra.mxu0 0.0
    %133 = vmatprep.subr.mxu0 0.0
    %134 = vmatpush2.msra.mxu0 0.0
    %135 = vmatprep.subr.mxu0 0.0
    %136 = vmatpush2.msra.mxu0 0.0
    %137 = vmatprep.subr.mxu0 0.0
    %138 = vmatpush2.msra.mxu0 0.0
    %139 = vmatprep.subr.mxu0 0.0
    %140 = vmatpush2.msra.mxu0 0.0
    %141 = vmatprep.subr.mxu0 0.0
    %142 = vmatpush2.msra.mxu0 0.0
    %143 = vmatprep.subr.mxu0 0.0
    %144 = vmatpush2.msra.mxu0 0.0
    %145 = vmatprep.subr.mxu0 0.0
    %146 = vmatpush2.msra.mxu0 0.0
    %147 = vmatprep.subr.mxu0 0.0
    %148 = vmatpush2.msra.mxu0 0.0
    %149 = vmatprep.subr.mxu0 0.0
    %150 = vmatpush2.msra.mxu0 0.0
    %151 = vmatprep.mubr.f32.mxu0 0.0
    %152 = vmatmul.mubr.f32.gmra.mxu0 %v62
    %v153 = vpop.f32.mrf.mxu0
    %v154 = vadd.f32 %v85, %v153
    %v155 = vpop.f32.mrf.mxu0
    %156 = vmatprep.mubr.f32.mxu0 0.0
    %157 = vmatmul.mubr.f32.gmra.mxu0 %v63
    %v158 = vpop.f32.mrf.mxu0
    %v159 = vadd.f32 %v85, %v158
    %v160 = vpop.f32.mrf.mxu0
    %161 = vdwg.mxu0
    %v162 = vmul.f32 %v154, 0.5
    %v163 = vmul.f32 %v159, 0.5
    %v164 = vmul.f32 %v154, 0.70710677
    %v165 = vmul.f32 %v159, 0.70710677
    %v166 = verf.f32.pop %v164
    %v167 = verf.f32.pop %v165
    %v168 = vadd.f32 %v166, 1.0
    %v169 = vadd.f32 %v167, 1.0
    %v170 = vmul.f32 %v162, %v168
    %v171 = vmul.f32 %v163, %v169
    %v172 = vld [vmem:[#allocation7] sm:$0xff]
    %v173 = vld [vmem:[#allocation7 + $0x8] sm:$0xff]
    %v174 = vld [vmem:[#allocation7 + $0x10] sm:$0xff]
    %v175 = vld [vmem:[#allocation7 + $0x18] sm:$0xff]
    %v176 = vld [vmem:[#allocation7 + $0x20] sm:$0xff]
    %v177 = vld [vmem:[#allocation7 + $0x28] sm:$0xff]
    %v178 = vld [vmem:[#allocation7 + $0x30] sm:$0xff]
    %v179 = vld [vmem:[#allocation7 + $0x38] sm:$0xff]
    %v180 = vld [vmem:[#allocation7 + $0x40] sm:$0xff]
    %v181 = vld [vmem:[#allocation7 + $0x48] sm:$0xff]
    %v182 = vld [vmem:[#allocation7 + $0x50] sm:$0xff]
    %v183 = vld [vmem:[#allocation7 + $0x58] sm:$0xff]
    %v184 = vld [vmem:[#allocation7 + $0x60] sm:$0xff]
    %v185 = vld [vmem:[#allocation7 + $0x68] sm:$0xff]
    %v186 = vld [vmem:[#allocation7 + $0x70] sm:$0xff]
    %v187 = vld [vmem:[#allocation7 + $0x78] sm:$0xff]
    %188 = vmatprep.subr.mxu0 0.0
    %189 = vmatpush1.msra.mxu0 %v187
    %190 = vmatprep.subr.mxu0 0.0
    %191 = vmatpush1.msra.mxu0 %v186
    %192 = vmatprep.subr.mxu0 0.0
    %193 = vmatpush1.msra.mxu0 %v185
    %194 = vmatprep.subr.mxu0 0.0
    %195 = vmatpush1.msra.mxu0 %v184
    %196 = vmatprep.subr.mxu0 0.0
    %197 = vmatpush1.msra.mxu0 %v183
    %198 = vmatprep.subr.mxu0 0.0
    %199 = vmatpush1.msra.mxu0 %v182
    %200 = vmatprep.subr.mxu0 0.0
    %201 = vmatpush1.msra.mxu0 %v181
    %202 = vmatprep.subr.mxu0 0.0
    %203 = vmatpush1.msra.mxu0 %v180
    %204 = vmatprep.subr.mxu0 0.0
    %205 = vmatpush1.msra.mxu0 %v179
    %206 = vmatprep.subr.mxu0 0.0
    %207 = vmatpush1.msra.mxu0 %v178
    %208 = vmatprep.subr.mxu0 0.0
    %209 = vmatpush1.msra.mxu0 %v177
    %210 = vmatprep.subr.mxu0 0.0
    %211 = vmatpush1.msra.mxu0 %v176
    %212 = vmatprep.subr.mxu0 0.0
    %213 = vmatpush1.msra.mxu0 %v175
    %214 = vmatprep.subr.mxu0 0.0
    %215 = vmatpush1.msra.mxu0 %v174
    %216 = vmatprep.subr.mxu0 0.0
    %217 = vmatpush1.msra.mxu0 %v173
    %218 = vmatprep.subr.mxu0 0.0
    %219 = vmatpush1.msra.mxu0 %v172
    %220 = vmatprep.subr.mxu0 0.0
    %221 = vmatpush2.msra.mxu0 0.0
    %222 = vmatprep.subr.mxu0 0.0
    %223 = vmatpush2.msra.mxu0 0.0
    %224 = vmatprep.subr.mxu0 0.0
    %225 = vmatpush2.msra.mxu0 0.0
    %226 = vmatprep.subr.mxu0 0.0
    %227 = vmatpush2.msra.mxu0 0.0
    %228 = vmatprep.subr.mxu0 0.0
    %229 = vmatpush2.msra.mxu0 0.0
    %230 = vmatprep.subr.mxu0 0.0
    %231 = vmatpush2.msra.mxu0 0.0
    %232 = vmatprep.subr.mxu0 0.0
    %233 = vmatpush2.msra.mxu0 0.0
    %234 = vmatprep.subr.mxu0 0.0
    %235 = vmatpush2.msra.mxu0 0.0
    %236 = vmatprep.subr.mxu0 0.0
    %237 = vmatpush2.msra.mxu0 0.0
    %238 = vmatprep.subr.mxu0 0.0
    %239 = vmatpush2.msra.mxu0 0.0
    %240 = vmatprep.subr.mxu0 0.0
    %241 = vmatpush2.msra.mxu0 0.0
    %242 = vmatprep.subr.mxu0 0.0
    %243 = vmatpush2.msra.mxu0 0.0
    %244 = vmatprep.subr.mxu0 0.0
    %245 = vmatpush2.msra.mxu0 0.0
    %246 = vmatprep.subr.mxu0 0.0
    %247 = vmatpush2.msra.mxu0 0.0
    %248 = vmatprep.subr.mxu0 0.0
    %249 = vmatpush2.msra.mxu0 0.0
    %250 = vmatprep.subr.mxu0 0.0
    %251 = vmatpush2.msra.mxu0 0.0
    %252 = vmatprep.mubr.f32.mxu0 0.0
    %253 = vmatmul.mubr.f32.gmra.mxu0 %v170
    %v254 = vpop.f32.mrf.mxu0
    %v255 = vadd.f32 0.0, %v254
    %v256 = vpop.f32.mrf.mxu0
    %257 = vmatprep.mubr.f32.mxu0 0.0
    %258 = vmatmul.mubr.f32.gmra.mxu0 %v171
    %v259 = vpop.f32.mrf.mxu0
    %v260 = vadd.f32 0.0, %v259
    %v261 = vpop.f32.mrf.mxu0
    %262 = vdwg.mxu0
    %p263 = scmp.eq.s32.totalorder 0, 0
    // Predicated region
    $region34: #{tpu_custom_call.1} parent=1 // pred_check
      %p264 = pneg %p263
    $region35: #{tpu_custom_call.1} parent=1 // pred_check_branch
      %266 = sbr.rel (%p264) target = $region37
    $region36: #{tpu_custom_call.1} parent=1 // pred_region
      %v267 = vld [vmem:[%s4] sm:$0x1]
      %v269 = vlaneseq
      %v270 = vshrl.u32 %v269, 7
      %v271 = vsub.s32 0, %v270
      %v272 = vrot.slane %v267, %v271
      %v274 = vadd.f32 %v255, %v272
      %v275 = vadd.f32 %v260, %v272
      %276 = vst [vmem:[#allocation8] sm:$0xff] %v274
      %277 = vst [vmem:[#allocation8 + $0x8] sm:$0xff] %v275
    $region37: #{tpu_custom_call.1} parent=1 // pred_fallthru
      _
    %p278 = scmp.gt.s32.totalorder 0, 0
    // Predicated region
    $region38: #{tpu_custom_call.1} parent=1 // pred_check
      %p279 = pneg %p278
    $region39: #{tpu_custom_call.1} parent=1 // pred_check_branch
      %281 = sbr.rel (%p279) target = $region41
    $region40: #{tpu_custom_call.1} parent=1 // pred_region
      %v282 = vld [vmem:[#allocation8] sm:$0xff]
      %v283 = vld [vmem:[#allocation8 + $0x8] sm:$0xff]
      %v284 = vadd.f32 %v282, %v255
      %v285 = vadd.f32 %v283, %v260
      %286 = vst [vmem:[#allocation8] sm:$0xff] %v284
      %287 = vst [vmem:[#allocation8 + $0x8] sm:$0xff] %v285
    $region41: #{tpu_custom_call.1} parent=1 // pred_fallthru
      _
    // Predicated region
    $region42: #{tpu_custom_call.1} parent=1 // pred_check
      _
    $region43: #{tpu_custom_call.1} parent=1 // pred_check_branch
      %289 = sbr.rel (0) target = $region45
    $region44: #{tpu_custom_call.1} parent=1 // pred_region
      %s291 = ssub.s32 256, 256
      %292 = vsyncadd [#allocation4], %s291
      %s293 = sshll.u32 [#allocation8], 4
      %s294 = int_to_ptr.vmem [resolvable:$true] %s293
      %299 = dma.vmem_to_hbm [thread:$0]  %s294, 256, %s5, [#allocation4], 128, 128, 8
    $region45: #{tpu_custom_call.1} parent=1 // pred_fallthru
      _
    // Predicated region
    $region46: #{tpu_custom_call.1} parent=1 // pred_check
      _
    $region47: #{tpu_custom_call.1} parent=1 // pred_check_branch
      %301 = sbr.rel (0) target = $region49
    $region48: #{tpu_custom_call.1} parent=1 // pred_region
      %302 = dma.done [#allocation4], 256
    $region49: #{tpu_custom_call.1} parent=1 // pred_fallthru
      _
    %303 = vsyncpa [#allocation3], 1
    %304 = vsyncpa [#allocation6], 1
    %305 = vsyncpa [#allocation4], 1

</llo_original>
